<compile_context>
chip_gen: v6e
topology: v6e:2x2x1
jax: 0.10.0
libtpu: 0.0.40
codegen_flags: <defaults>
</compile_context>

<pallas_src>
import functools

import jax
import jax.numpy as jnp
from jax.experimental import pallas as pl
from jax.experimental.pallas import tpu as pltpu


def _round_up(x, m):
    return (x + m - 1) // m * m


def _make_rnn_kernel(L, num_chains):
    """Builds the fused recurrence + max-pool + linear kernel for a static L."""
    assert L >= 1

    def kernel(xw_ref,    # (L, TB, H) bf16: emb@W_ih + b_ih + b_hh, time-major
               whh_ref,   # (H, H)     f32
               wout_ref,  # (H, Opad)  f32
               bout_ref,  # (1, Opad)  f32
               out_ref):  # (TB, Opad) f32 logits
        _, TB, H = xw_ref.shape
        whh = whh_ref[...]                              # resident across the whole loop
        C = TB // num_chains

        hs = [jnp.zeros((C, H), jnp.float32) for _ in range(num_chains)]
        ms = [jnp.full((C, H), -jnp.inf, jnp.float32) for _ in range(num_chains)]

        # Elman recurrence. L is small & static, so a Python unroll is fine here;
        # the `num_chains` independent sub-chains are data-independent so the LLO
        # scheduler interleaves their dot->tanh updates to hide MXU/EUP latency.
        # TODO(synk): switch to lax.fori_loop(..., unroll=2..4) if L grows beyond ~32.
        for t in range(L):
            xw_t = xw_ref[t]                            # (TB, H) bf16
            for c in range(num_chains):
                # bf16 + f32 promotes to f32; tanh / max stay f32.
                hs[c] = jnp.tanh(
                    xw_t[c * C:(c + 1) * C, :]
                    + jnp.dot(hs[c], whh, preferred_element_type=jnp.float32)
                )
            for c in range(num_chains):
                ms[c] = jnp.maximum(ms[c], hs[c])       # MaxPool1d(L) over time

        m = ms[0] if num_chains == 1 else jnp.concatenate(ms, axis=0)
        out_ref[...] = (
            jnp.dot(m, wout_ref[...], preferred_element_type=jnp.float32)
            + bout_ref[...]
        )

    return kernel


def _pick_batch_tile(B):
    """Batch tile selection.

    Constraints / goals (not VMEM -- the streamed tile is tiny):
      * TB must be a multiple of 8 (sublane) unless it equals the padded batch.
      * Prefer >= 2 grid points when the batch allows it so v7x's 2 TensorCores
        both get work under dimension_semantics=("parallel",).
      * Otherwise make the tile as large as possible: the kernel is bound by the
        serial per-step latency, so more rows per recurrence step amortize it and
        fewer grid steps cut per-step pipeline overhead. Cap at 1024 rows.
    """
    B8 = _round_up(B, 8)
    if B8 >= 16:
        tb = _round_up(pl.cdiv(B8, 2), 16)   # ~2 grid points, tile multiple of 16
    else:
        tb = B8                              # tiny batch: single tile
    return min(tb, 1024)


def torch_model_forward(tokens, params):
    """tokens: (B, L) int32. Returns logits (B, O)."""
    emb, w_ih, w_hh, b_ih, b_hh, w_out, b_out = (
        params["emb"], params["w_ih"], params["w_hh"],
        params["b_ih"], params["b_hh"], params["w_out"], params["b_out"],
    )
    B, L = tokens.shape
    H = w_hh.shape[0]
    O = w_out.shape[1]

    # Embedding followed by a linear map == gather from a precomputed projection
    # table (bias folded in). Negligible precompute: (V+1, D) @ (D, H).
    proj_table = jnp.dot(emb, w_ih, preferred_element_type=jnp.float32) \
        + (b_ih + b_hh)[None, :]                         # (V+1, H) f32
    proj_bf = proj_table.astype(jnp.bfloat16)

    # Gather directly into time-major order (no transpose copy of the big activation)
    # and stream it in bf16 (halves HBM bytes; MXU-side precision unaffected since
    # the in-kernel accumulation is f32).
    xw_tm = jnp.take(proj_bf, tokens.T, axis=0)          # (L, B, H) bf16

    TB = _pick_batch_tile(B)
    B_pad = _round_up(B, TB)
    O_pad = _round_up(O, 128)
    num_chains = 2 if (TB >= 16 and TB % 16 == 0) else 1

    xw_tm = jnp.pad(xw_tm, ((0, 0), (0, B_pad - B), (0, 0)))
    w_hh_f32 = w_hh.astype(jnp.float32)
    w_out_p = jnp.pad(w_out, ((0, 0), (0, O_pad - O))).astype(jnp.float32)
    b_out_p = jnp.pad(b_out, (0, O_pad - O)).reshape(1, O_pad).astype(jnp.float32)

    grid = (B_pad // TB,)
    kernel = _make_rnn_kernel(L, num_chains)

    logits_p = pl.pallas_call(
        kernel,
        out_shape=jax.ShapeDtypeStruct((B_pad, O_pad), jnp.float32),
        grid_spec=pltpu.PrefetchScalarGridSpec(
            num_scalar_prefetch=0,
            grid=grid,
            in_specs=[
                pl.BlockSpec((L, TB, H), lambda i: (0, i, 0)),   # per-batch-tile seq (bf16)
                pl.BlockSpec((H, H), lambda i: (0, 0)),          # W_hh (resident, f32)
                pl.BlockSpec((H, O_pad), lambda i: (0, 0)),      # W_out (resident, f32)
                pl.BlockSpec((1, O_pad), lambda i: (0, 0)),      # b_out (resident, f32)
            ],
            out_specs=pl.BlockSpec((TB, O_pad), lambda i: (i, 0)),
        ),
        compiler_params=pltpu.CompilerParams(
            dimension_semantics=("parallel",),                   # batch tiles -> 2 TCs on v7x
        ),
    )(xw_tm, w_hh_f32, w_out_p, b_out_p)

    # Padded batch rows hold b_out and padded O columns hold junk/bias; slice them
    # off right here, adjacent to the pallas_call.
    return logits_p[:B, :O]


def _reference_forward(tokens, params):
    """Pure-JAX reference (mirrors the PyTorch forward, f32 everywhere)."""
    emb, w_ih, w_hh, b_ih, b_hh, w_out, b_out = (
        params["emb"], params["w_ih"], params["w_hh"],
        params["b_ih"], params["b_hh"], params["w_out"], params["b_out"],
    )
    x = jnp.take(emb, tokens, axis=0)                    # (B, L, D)
    B, L, _ = x.shape
    H = w_hh.shape[0]
    h = jnp.zeros((B, H), jnp.float32)
    outs = []
    for t in range(L):
        h = jnp.tanh(x[:, t, :] @ w_ih + b_ih + h @ w_hh + b_hh)
        outs.append(h)
    pooled = jnp.max(jnp.stack(outs, axis=1), axis=1)    # MaxPool1d over time
    return pooled @ w_out + b_out


def init_params(key, vocab_size, input_dim, hidden_size, output_size):
    ks = jax.random.split(key, 7)
    scale = 0.1
    return {
        # nn.Embedding(len(vocab) + 1, input_dim)
        "emb": scale * jax.random.normal(ks[0], (vocab_size + 1, input_dim), jnp.float32),
        # nn.RNN weights, stored (in, out) so the math is x @ W
        "w_ih": scale * jax.random.normal(ks[1], (input_dim, hidden_size), jnp.float32),
        "w_hh": scale * jax.random.normal(ks[2], (hidden_size, hidden_size), jnp.float32),
        "b_ih": scale * jax.random.normal(ks[3], (hidden_size,), jnp.float32),
        "b_hh": scale * jax.random.normal(ks[4], (hidden_size,), jnp.float32),
        # nn.Linear(hidden_size, output_size)
        "w_out": scale * jax.random.normal(ks[5], (hidden_size, output_size), jnp.float32),
        "b_out": scale * jax.random.normal(ks[6], (output_size,), jnp.float32),
    }


if __name__ == "__main__":
    # Small shapes consistent with the module's forward.
    vocab_size = 10          # len(vocab)
    sentence_length = 8      # L
    hidden_size = 32         # H
    input_dim = 16           # D
    output_size = 5          # O
    batch = 2                # B

    key = jax.random.PRNGKey(0)
    pkey, tkey = jax.random.split(key)
    params = init_params(pkey, vocab_size, input_dim, hidden_size, output_size)
    tokens = jax.random.randint(
        tkey, (batch, sentence_length), 0, vocab_size + 1, dtype=jnp.int32
    )

    # TODO(synk): training branch (cross_entropy loss when y is given) is not implemented;
    # only the inference path (y=None -> logits) is reproduced.
    logits = torch_model_forward(tokens, params)
    jax.block_until_ready(logits)
    assert logits.shape == (batch, output_size)

    # Numerical check against the plain-JAX reference (loose tolerance: xw streamed bf16).
    ref = _reference_forward(tokens, params)
    assert jnp.allclose(logits, ref, rtol=2e-2, atol=2e-2), (logits, ref)

    print("KERNEL_OK")
</pallas_src>

<mosaic_0001>
module attributes {stable_mosaic.version = 11 : i64} {
  func.func @kernel(%arg0: i32, %arg1: memref<8x8x32xbf16, #tpu.memory_space<vmem>>, %arg2: memref<32x32xf32, #tpu.memory_space<vmem>>, %arg3: memref<32x128xf32, #tpu.memory_space<vmem>>, %arg4: memref<1x128xf32, #tpu.memory_space<vmem>>, %arg5: memref<8x128xf32, #tpu.memory_space<vmem>>) attributes {dimension_semantics = [#tpu.dimension_semantics<parallel>], iteration_bounds = array<i64: 1>, scalar_prefetch = 0 : i64, scratch_operands = 0 : i64, tpu.core_type = #tpu.core_type<tc>, window_params = [{transform_indices = @transform_0, window_bounds = array<i64: 8, 8, 32>}, {pipeline_mode = #tpu.pipeline_mode<synchronous>, transform_indices = @transform_1, window_bounds = array<i64: 32, 32>}, {pipeline_mode = #tpu.pipeline_mode<synchronous>, transform_indices = @transform_2, window_bounds = array<i64: 32, 128>}, {pipeline_mode = #tpu.pipeline_mode<synchronous>, transform_indices = @transform_3, window_bounds = array<i64: 1, 128>}, {transform_indices = @transform_4, window_bounds = array<i64: 8, 128>}]} {
    %c0 = arith.constant 0 : index
    %c0_0 = arith.constant 0 : index
    %0 = vector.load %arg2[%c0, %c0_0] : memref<32x32xf32, #tpu.memory_space<vmem>>, vector<32x32xf32>
    %cst = arith.constant 0.000000e+00 : f32
    %1 = vector.broadcast %cst : f32 to vector<8x32xf32>
    %cst_1 = arith.constant 0xFF800000 : f32
    %2 = vector.broadcast %cst_1 : f32 to vector<8x32xf32>
    %c0_2 = arith.constant 0 : index
    %c0_3 = arith.constant 0 : index
    %c0_4 = arith.constant 0 : index
    %3 = vector.load %arg1[%c0_2, %c0_3, %c0_4] : memref<8x8x32xbf16, #tpu.memory_space<vmem>>, vector<1x8x32xbf16>
    %4 = vector.shape_cast %3 : vector<1x8x32xbf16> to vector<8x32xbf16>
    %cst_5 = arith.constant dense<0.000000e+00> : vector<8x32xf32>
    %5 = tpu.matmul %1, %0, %cst_5 {dimension_numbers = #tpu.dot_dimension_numbers<[1], [0], [0], [1], [0, 0, 1, 1], [], []>} : vector<8x32xf32>, vector<32x32xf32>, vector<8x32xf32> -> vector<8x32xf32>
    %6 = arith.extf %4 : vector<8x32xbf16> to vector<8x32xf32>
    %7 = arith.addf %6, %5 : vector<8x32xf32>
    %8 = math.tanh %7 : vector<8x32xf32>
    %9 = arith.maximumf %2, %8 : vector<8x32xf32>
    %c1 = arith.constant 1 : index
    %c0_6 = arith.constant 0 : index
    %c0_7 = arith.constant 0 : index
    %10 = vector.load %arg1[%c1, %c0_6, %c0_7] : memref<8x8x32xbf16, #tpu.memory_space<vmem>>, vector<1x8x32xbf16>
    %11 = vector.shape_cast %10 : vector<1x8x32xbf16> to vector<8x32xbf16>
    %cst_8 = arith.constant dense<0.000000e+00> : vector<8x32xf32>
    %12 = tpu.matmul %8, %0, %cst_8 {dimension_numbers = #tpu.dot_dimension_numbers<[1], [0], [0], [1], [0, 0, 1, 1], [], []>} : vector<8x32xf32>, vector<32x32xf32>, vector<8x32xf32> -> vector<8x32xf32>
    %13 = arith.extf %11 : vector<8x32xbf16> to vector<8x32xf32>
    %14 = arith.addf %13, %12 : vector<8x32xf32>
    %15 = math.tanh %14 : vector<8x32xf32>
    %16 = arith.maximumf %9, %15 : vector<8x32xf32>
    %c2 = arith.constant 2 : index
    %c0_9 = arith.constant 0 : index
    %c0_10 = arith.constant 0 : index
    %17 = vector.load %arg1[%c2, %c0_9, %c0_10] : memref<8x8x32xbf16, #tpu.memory_space<vmem>>, vector<1x8x32xbf16>
    %18 = vector.shape_cast %17 : vector<1x8x32xbf16> to vector<8x32xbf16>
    %cst_11 = arith.constant dense<0.000000e+00> : vector<8x32xf32>
    %19 = tpu.matmul %15, %0, %cst_11 {dimension_numbers = #tpu.dot_dimension_numbers<[1], [0], [0], [1], [0, 0, 1, 1], [], []>} : vector<8x32xf32>, vector<32x32xf32>, vector<8x32xf32> -> vector<8x32xf32>
    %20 = arith.extf %18 : vector<8x32xbf16> to vector<8x32xf32>
    %21 = arith.addf %20, %19 : vector<8x32xf32>
    %22 = math.tanh %21 : vector<8x32xf32>
    %23 = arith.maximumf %16, %22 : vector<8x32xf32>
    %c3 = arith.constant 3 : index
    %c0_12 = arith.constant 0 : index
    %c0_13 = arith.constant 0 : index
    %24 = vector.load %arg1[%c3, %c0_12, %c0_13] : memref<8x8x32xbf16, #tpu.memory_space<vmem>>, vector<1x8x32xbf16>
    %25 = vector.shape_cast %24 : vector<1x8x32xbf16> to vector<8x32xbf16>
    %cst_14 = arith.constant dense<0.000000e+00> : vector<8x32xf32>
    %26 = tpu.matmul %22, %0, %cst_14 {dimension_numbers = #tpu.dot_dimension_numbers<[1], [0], [0], [1], [0, 0, 1, 1], [], []>} : vector<8x32xf32>, vector<32x32xf32>, vector<8x32xf32> -> vector<8x32xf32>
    %27 = arith.extf %25 : vector<8x32xbf16> to vector<8x32xf32>
    %28 = arith.addf %27, %26 : vector<8x32xf32>
    %29 = math.tanh %28 : vector<8x32xf32>
    %30 = arith.maximumf %23, %29 : vector<8x32xf32>
    %c4 = arith.constant 4 : index
    %c0_15 = arith.constant 0 : index
    %c0_16 = arith.constant 0 : index
    %31 = vector.load %arg1[%c4, %c0_15, %c0_16] : memref<8x8x32xbf16, #tpu.memory_space<vmem>>, vector<1x8x32xbf16>
    %32 = vector.shape_cast %31 : vector<1x8x32xbf16> to vector<8x32xbf16>
    %cst_17 = arith.constant dense<0.000000e+00> : vector<8x32xf32>
    %33 = tpu.matmul %29, %0, %cst_17 {dimension_numbers = #tpu.dot_dimension_numbers<[1], [0], [0], [1], [0, 0, 1, 1], [], []>} : vector<8x32xf32>, vector<32x32xf32>, vector<8x32xf32> -> vector<8x32xf32>
    %34 = arith.extf %32 : vector<8x32xbf16> to vector<8x32xf32>
    %35 = arith.addf %34, %33 : vector<8x32xf32>
    %36 = math.tanh %35 : vector<8x32xf32>
    %37 = arith.maximumf %30, %36 : vector<8x32xf32>
    %c5 = arith.constant 5 : index
    %c0_18 = arith.constant 0 : index
    %c0_19 = arith.constant 0 : index
    %38 = vector.load %arg1[%c5, %c0_18, %c0_19] : memref<8x8x32xbf16, #tpu.memory_space<vmem>>, vector<1x8x32xbf16>
    %39 = vector.shape_cast %38 : vector<1x8x32xbf16> to vector<8x32xbf16>
    %cst_20 = arith.constant dense<0.000000e+00> : vector<8x32xf32>
    %40 = tpu.matmul %36, %0, %cst_20 {dimension_numbers = #tpu.dot_dimension_numbers<[1], [0], [0], [1], [0, 0, 1, 1], [], []>} : vector<8x32xf32>, vector<32x32xf32>, vector<8x32xf32> -> vector<8x32xf32>
    %41 = arith.extf %39 : vector<8x32xbf16> to vector<8x32xf32>
    %42 = arith.addf %41, %40 : vector<8x32xf32>
    %43 = math.tanh %42 : vector<8x32xf32>
    %44 = arith.maximumf %37, %43 : vector<8x32xf32>
    %c6 = arith.constant 6 : index
    %c0_21 = arith.constant 0 : index
    %c0_22 = arith.constant 0 : index
    %45 = vector.load %arg1[%c6, %c0_21, %c0_22] : memref<8x8x32xbf16, #tpu.memory_space<vmem>>, vector<1x8x32xbf16>
    %46 = vector.shape_cast %45 : vector<1x8x32xbf16> to vector<8x32xbf16>
    %cst_23 = arith.constant dense<0.000000e+00> : vector<8x32xf32>
    %47 = tpu.matmul %43, %0, %cst_23 {dimension_numbers = #tpu.dot_dimension_numbers<[1], [0], [0], [1], [0, 0, 1, 1], [], []>} : vector<8x32xf32>, vector<32x32xf32>, vector<8x32xf32> -> vector<8x32xf32>
    %48 = arith.extf %46 : vector<8x32xbf16> to vector<8x32xf32>
    %49 = arith.addf %48, %47 : vector<8x32xf32>
    %50 = math.tanh %49 : vector<8x32xf32>
    %51 = arith.maximumf %44, %50 : vector<8x32xf32>
    %c7 = arith.constant 7 : index
    %c0_24 = arith.constant 0 : index
    %c0_25 = arith.constant 0 : index
    %52 = vector.load %arg1[%c7, %c0_24, %c0_25] : memref<8x8x32xbf16, #tpu.memory_space<vmem>>, vector<1x8x32xbf16>
    %53 = vector.shape_cast %52 : vector<1x8x32xbf16> to vector<8x32xbf16>
    %cst_26 = arith.constant dense<0.000000e+00> : vector<8x32xf32>
    %54 = tpu.matmul %50, %0, %cst_26 {dimension_numbers = #tpu.dot_dimension_numbers<[1], [0], [0], [1], [0, 0, 1, 1], [], []>} : vector<8x32xf32>, vector<32x32xf32>, vector<8x32xf32> -> vector<8x32xf32>
    %55 = arith.extf %53 : vector<8x32xbf16> to vector<8x32xf32>
    %56 = arith.addf %55, %54 : vector<8x32xf32>
    %57 = math.tanh %56 : vector<8x32xf32>
    %58 = arith.maximumf %51, %57 : vector<8x32xf32>
    %c0_27 = arith.constant 0 : index
    %c0_28 = arith.constant 0 : index
    %59 = vector.load %arg3[%c0_27, %c0_28] : memref<32x128xf32, #tpu.memory_space<vmem>>, vector<32x128xf32>
    %cst_29 = arith.constant dense<0.000000e+00> : vector<8x128xf32>
    %60 = tpu.matmul %58, %59, %cst_29 {dimension_numbers = #tpu.dot_dimension_numbers<[1], [0], [0], [1], [0, 0, 1, 1], [], []>} : vector<8x32xf32>, vector<32x128xf32>, vector<8x128xf32> -> vector<8x128xf32>
    %c0_30 = arith.constant 0 : index
    %c0_31 = arith.constant 0 : index
    %61 = vector.load %arg4[%c0_30, %c0_31] : memref<1x128xf32, #tpu.memory_space<vmem>>, vector<1x128xf32>
    %62 = vector.broadcast %61 : vector<1x128xf32> to vector<8x128xf32>
    %63 = arith.addf %60, %62 : vector<8x128xf32>
    %c0_32 = arith.constant 0 : index
    %c0_33 = arith.constant 0 : index
    %64 = vector.load %arg5[%c0_32, %c0_33] : memref<8x128xf32, #tpu.memory_space<vmem>>, vector<8x128xf32>
    tpu.vector_store %arg5[%c0_32, %c0_33], %63 {strides = array<i32>} : memref<8x128xf32, #tpu.memory_space<vmem>>, vector<8x128xf32>,
    return
  }
  func.func @transform_0(%arg0: i32) -> (i32, i32, i32) {
    %c0_i32 = arith.constant 0 : i32
    %c0_i32_0 = arith.constant 0 : i32
    %c0_i32_1 = arith.constant 0 : i32
    return %c0_i32, %arg0, %c0_i32_0 : i32, i32, i32
  }
  func.func @transform_1(%arg0: i32) -> (i32, i32) {
    %c0_i32 = arith.constant 0 : i32
    %c0_i32_0 = arith.constant 0 : i32
    %c0_i32_1 = arith.constant 0 : i32
    return %c0_i32, %c0_i32_0 : i32, i32
  }
  func.func @transform_2(%arg0: i32) -> (i32, i32) {
    %c0_i32 = arith.constant 0 : i32
    %c0_i32_0 = arith.constant 0 : i32
    %c0_i32_1 = arith.constant 0 : i32
    return %c0_i32, %c0_i32_0 : i32, i32
  }
  func.func @transform_3(%arg0: i32) -> (i32, i32) {
    %c0_i32 = arith.constant 0 : i32
    %c0_i32_0 = arith.constant 0 : i32
    %c0_i32_1 = arith.constant 0 : i32
    return %c0_i32, %c0_i32_0 : i32, i32
  }
  func.func @transform_4(%arg0: i32) -> (i32, i32) {
    %c0_i32 = arith.constant 0 : i32
    %c0_i32_0 = arith.constant 0 : i32
    return %arg0, %c0_i32 : i32, i32
  }
}

</mosaic_0001>

<llo_original>
// kernel: tpu_custom_call.1
$region0: #{tpu_custom_call.1}
  #allocation0 [shape = 'u32[]', space=smem, size = 0x4, offset = 0x4, fixed_abs, tag = 'smem constant byte address 0x4 - core index']
  #allocation1 [shape = 'u32[144,128]{1,0:T(1,128)}', space=vmem, size = 0x12000, scoped, tag = 'internal scratch']
  %s0 = inlined_call_operand.hbm [shape: bf16[8,8,32], index: 0, kind: input, shape index: {}]
  %s1 = inlined_call_operand.hbm [shape: f32[32,32], index: 1, kind: input, shape index: {}]
  %s2 = inlined_call_operand.hbm [shape: f32[32,128], index: 2, kind: input, shape index: {}]
  %s3 = inlined_call_operand.vmem [shape: f32[1,128], index: 3, kind: input, shape index: {}]
  %s4 = inlined_call_operand.hbm [shape: f32[8,128], index: 4, kind: output, shape index: {}]
  %s5 = sld [smem:[#allocation0]]
  $region38: #{tpu_custom_call.1} parent=0
    _
  %s7 = ssub.s32 1, %s5
  %s8 = scalar_select 0, %s7, %s5
  $region1: #{tpu_custom_call.1} parent=0
    #allocation2 [shape = 'u8[16384]{0}', space=vmem, size = 0x4000, scoped, tag = 'input window, operand 0, single buffered']
    #allocation3 [shape = 's32[1]{0}', space=sflag, size = 0x4, scoped, tag = 'scoped memory for tpu_custom_call.1']
    #allocation4 [shape = 's32[1]{0}', space=sflag, size = 0x4, scoped, tag = 'scoped memory for tpu_custom_call.1']
    #allocation5 [shape = 'u8[16384]{0}', space=vmem, size = 0x4000, scoped, tag = 'input window, operand 1, single buffered']
    #allocation6 [shape = 's32[1]{0}', space=sflag, size = 0x4, scoped, tag = 'scoped memory for tpu_custom_call.1']
    #allocation7 [shape = 'u8[16384]{0}', space=vmem, size = 0x4000, scoped, tag = 'input window, operand 2, single buffered']
    #allocation8 [shape = 'u8[4096]{0}', space=vmem, size = 0x1000, scoped, tag = 'output window, operand 0, single buffered']
    %9 = vsyncpa [#allocation3], 0
    %10 = vsyncpa [#allocation6], 0
    %11 = vsyncpa [#allocation4], 0
    // Predicated region
    $region2: #{tpu_custom_call.1} parent=1 // pred_check
      _
    $region3: #{tpu_custom_call.1} parent=1 // pred_check_branch
      %13 = sbr.rel (0) target = $region5
    $region4: #{tpu_custom_call.1} parent=1 // pred_region
      %s15 = ssub.s32 512, 512
      %16 = vsyncadd [#allocation3], %s15
      %s17 = sshll.u32 [#allocation2], 4
      %s18 = int_to_ptr.vmem [resolvable:$true] %s17
      %23 = dma.hbm_to_vmem [thread:$0]  %s0, 512, %s18, [#allocation3], 64, 64, 4
    $region5: #{tpu_custom_call.1} parent=1 // pred_fallthru
      _
    // Predicated region
    $region6: #{tpu_custom_call.1} parent=1 // pred_check
      _
    $region7: #{tpu_custom_call.1} parent=1 // pred_check_branch
      %25 = sbr.rel (0) target = $region9
    $region8: #{tpu_custom_call.1} parent=1 // pred_region
      %s27 = ssub.s32 512, 512
      %28 = vsyncadd [#allocation6], %s27
      %s29 = sshll.u32 [#allocation5], 4
      %s30 = int_to_ptr.vmem [resolvable:$true] %s29
      %35 = dma.hbm_to_vmem [thread:$0]  %s1, 512, %s30, [#allocation6], 128, 128, 8
    $region9: #{tpu_custom_call.1} parent=1 // pred_fallthru
      _
    // Predicated region
    $region10: #{tpu_custom_call.1} parent=1 // pred_check
      _
    $region11: #{tpu_custom_call.1} parent=1 // pred_check_branch
      %37 = sbr.rel (0) target = $region13
    $region12: #{tpu_custom_call.1} parent=1 // pred_region
      %s39 = ssub.s32 512, 512
      %40 = vsyncadd [#allocation6], %s39
      %s41 = sshll.u32 [#allocation7], 4
      %s42 = int_to_ptr.vmem [resolvable:$true] %s41
      %47 = dma.hbm_to_vmem [thread:$0]  %s2, 512, %s42, [#allocation6], 128, 128, 8
    $region13: #{tpu_custom_call.1} parent=1 // pred_fallthru
      _
    // Predicated region
    $region14: #{tpu_custom_call.1} parent=1 // pred_check
      _
    $region15: #{tpu_custom_call.1} parent=1 // pred_check_branch
      %49 = sbr.rel (0) target = $region17
    $region16: #{tpu_custom_call.1} parent=1 // pred_region
      _
    $region17: #{tpu_custom_call.1} parent=1 // pred_fallthru
      _
    // Predicated region
    $region18: #{tpu_custom_call.1} parent=1 // pred_check
      _
    $region19: #{tpu_custom_call.1} parent=1 // pred_check_branch
      %51 = sbr.rel (0) target = $region21
    $region20: #{tpu_custom_call.1} parent=1 // pred_region
      %52 = dma.done [#allocation3], 512
    $region21: #{tpu_custom_call.1} parent=1 // pred_fallthru
      _
    // Predicated region
    $region22: #{tpu_custom_call.1} parent=1 // pred_check
      _
    $region23: #{tpu_custom_call.1} parent=1 // pred_check_branch
      %54 = sbr.rel (0) target = $region25
    $region24: #{tpu_custom_call.1} parent=1 // pred_region
      %55 = dma.done [#allocation6], 512
    $region25: #{tpu_custom_call.1} parent=1 // pred_fallthru
      _
    // Predicated region
    $region26: #{tpu_custom_call.1} parent=1 // pred_check
      _
    $region27: #{tpu_custom_call.1} parent=1 // pred_check_branch
      %57 = sbr.rel (0) target = $region29
    $region28: #{tpu_custom_call.1} parent=1 // pred_region
      %58 = dma.done [#allocation6], 512
    $region29: #{tpu_custom_call.1} parent=1 // pred_fallthru
      _
    %v59 = vld [vmem:[#allocation5] sm:$0xff]
    %v60 = vld [vmem:[#allocation5 + $0x8] sm:$0xff]
    %v61 = vld [vmem:[#allocation5 + $0x10] sm:$0xff]
    %v62 = vld [vmem:[#allocation5 + $0x18] sm:$0xff]
    %v63 = vld [vmem:[#allocation2] sm:$0xf]
    %vm64 = vcmask 261120
    %v66 = vsel %vm64, 0.0, 0
    %68 = vmatprep.subr.mxu0 0.0
    %69 = vmatpush1.msra.mxu0 0.0
    %70 = vmatprep.subr.mxu0 0.0
    %71 = vmatpush1.msra.mxu0 0.0
    %72 = vmatprep.subr.mxu0 0.0
    %73 = vmatpush1.msra.mxu0 0.0
    %74 = vmatprep.subr.mxu0 0.0
    %75 = vmatpush1.msra.mxu0 0.0
    %76 = vmatprep.subr.mxu0 0.0
    %77 = vmatpush1.msra.mxu0 0.0
    %78 = vmatprep.subr.mxu0 0.0
    %79 = vmatpush1.msra.mxu0 0.0
    %80 = vmatprep.subr.mxu0 0.0
    %81 = vmatpush1.msra.mxu0 0.0
    %82 = vmatprep.subr.mxu0 0.0
    %83 = vmatpush1.msra.mxu0 0.0
    %84 = vmatprep.subr.mxu0 0.0
    %85 = vmatpush1.msra.mxu0 0.0
    %86 = vmatprep.subr.mxu0 0.0
    %87 = vmatpush1.msra.mxu0 0.0
    %88 = vmatprep.subr.mxu0 0.0
    %89 = vmatpush1.msra.mxu0 0.0
    %90 = vmatprep.subr.mxu0 0.0
    %91 = vmatpush1.msra.mxu0 0.0
    %92 = vmatprep.subr.mxu0 0.0
    %93 = vmatpush1.msra.mxu0 %v62
    %94 = vmatprep.subr.mxu0 0.0
    %95 = vmatpush1.msra.mxu0 %v61
    %96 = vmatprep.subr.mxu0 0.0
    %97 = vmatpush1.msra.mxu0 %v60
    %98 = vmatprep.subr.mxu0 0.0
    %99 = vmatpush1.msra.mxu0 %v59
    %100 = vmatprep.subr.mxu0 0.0
    %101 = vmatpush2.msra.mxu0 0.0
    %102 = vmatprep.subr.mxu0 0.0
    %103 = vmatpush2.msra.mxu0 0.0
    %104 = vmatprep.subr.mxu0 0.0
    %105 = vmatpush2.msra.mxu0 0.0
    %106 = vmatprep.subr.mxu0 0.0
    %107 = vmatpush2.msra.mxu0 0.0
    %108 = vmatprep.subr.mxu0 0.0
    %109 = vmatpush2.msra.mxu0 0.0
    %110 = vmatprep.subr.mxu0 0.0
    %111 = vmatpush2.msra.mxu0 0.0
    %112 = vmatprep.subr.mxu0 0.0
    %113 = vmatpush2.msra.mxu0 0.0
    %114 = vmatprep.subr.mxu0 0.0
    %115 = vmatpush2.msra.mxu0 0.0
    %116 = vmatprep.subr.mxu0 0.0
    %117 = vmatpush2.msra.mxu0 0.0
    %118 = vmatprep.subr.mxu0 0.0
    %119 = vmatpush2.msra.mxu0 0.0
    %120 = vmatprep.subr.mxu0 0.0
    %121 = vmatpush2.msra.mxu0 0.0
    %122 = vmatprep.subr.mxu0 0.0
    %123 = vmatpush2.msra.mxu0 0.0
    %124 = vmatprep.subr.mxu0 0.0
    %125 = vmatpush2.msra.mxu0 0.0
    %126 = vmatprep.subr.mxu0 0.0
    %127 = vmatpush2.msra.mxu0 0.0
    %128 = vmatprep.subr.mxu0 0.0
    %129 = vmatpush2.msra.mxu0 0.0
    %130 = vmatprep.subr.mxu0 0.0
    %131 = vmatpush2.msra.mxu0 0.0
    %132 = vmatprep.mubr.f32.mxu0 0.0
    %133 = vmatmul.mubr.f32.gmra.mxu0 %v66
    %v134 = vpop.f32.mrf.mxu0
    %v135 = vadd.f32 0.0, %v134
    %v136 = vpop.f32.mrf.mxu0
    %137 = vdwg.mxu0
    %v138 = vunpack.c.l.bf16 %v63
    %v139 = vadd.f32 %v138, %v135
    %v140 = vtanh.pop %v139
    %s141 = scalar_lea.vmem [#allocation2], 4
    %v142 = vld [vmem:[%s141] sm:$0xf]
    %v144 = vsel %vm64, %v140, 0
    %146 = vmatprep.subr.mxu0 0.0
    %147 = vmatpush1.msra.mxu0 0.0
    %148 = vmatprep.subr.mxu0 0.0
    %149 = vmatpush1.msra.mxu0 0.0
    %150 = vmatprep.subr.mxu0 0.0
    %151 = vmatpush1.msra.mxu0 0.0
    %152 = vmatprep.subr.mxu0 0.0
    %153 = vmatpush1.msra.mxu0 0.0
    %154 = vmatprep.subr.mxu0 0.0
    %155 = vmatpush1.msra.mxu0 0.0
    %156 = vmatprep.subr.mxu0 0.0
    %157 = vmatpush1.msra.mxu0 0.0
    %158 = vmatprep.subr.mxu0 0.0
    %159 = vmatpush1.msra.mxu0 0.0
    %160 = vmatprep.subr.mxu0 0.0
    %161 = vmatpush1.msra.mxu0 0.0
    %162 = vmatprep.subr.mxu0 0.0
    %163 = vmatpush1.msra.mxu0 0.0
    %164 = vmatprep.subr.mxu0 0.0
    %165 = vmatpush1.msra.mxu0 0.0
    %166 = vmatprep.subr.mxu0 0.0
    %167 = vmatpush1.msra.mxu0 0.0
    %168 = vmatprep.subr.mxu0 0.0
    %169 = vmatpush1.msra.mxu0 0.0
    %170 = vmatprep.subr.mxu0 0.0
    %171 = vmatpush1.msra.mxu0 %v62
    %172 = vmatprep.subr.mxu0 0.0
    %173 = vmatpush1.msra.mxu0 %v61
    %174 = vmatprep.subr.mxu0 0.0
    %175 = vmatpush1.msra.mxu0 %v60
    %176 = vmatprep.subr.mxu0 0.0
    %177 = vmatpush1.msra.mxu0 %v59
    %178 = vmatprep.subr.mxu0 0.0
    %179 = vmatpush2.msra.mxu0 0.0
    %180 = vmatprep.subr.mxu0 0.0
    %181 = vmatpush2.msra.mxu0 0.0
    %182 = vmatprep.subr.mxu0 0.0
    %183 = vmatpush2.msra.mxu0 0.0
    %184 = vmatprep.subr.mxu0 0.0
    %185 = vmatpush2.msra.mxu0 0.0
    %186 = vmatprep.subr.mxu0 0.0
    %187 = vmatpush2.msra.mxu0 0.0
    %188 = vmatprep.subr.mxu0 0.0
    %189 = vmatpush2.msra.mxu0 0.0
    %190 = vmatprep.subr.mxu0 0.0
    %191 = vmatpush2.msra.mxu0 0.0
    %192 = vmatprep.subr.mxu0 0.0
    %193 = vmatpush2.msra.mxu0 0.0
    %194 = vmatprep.subr.mxu0 0.0
    %195 = vmatpush2.msra.mxu0 0.0
    %196 = vmatprep.subr.mxu0 0.0
    %197 = vmatpush2.msra.mxu0 0.0
    %198 = vmatprep.subr.mxu0 0.0
    %199 = vmatpush2.msra.mxu0 0.0
    %200 = vmatprep.subr.mxu0 0.0
    %201 = vmatpush2.msra.mxu0 0.0
    %202 = vmatprep.subr.mxu0 0.0
    %203 = vmatpush2.msra.mxu0 0.0
    %204 = vmatprep.subr.mxu0 0.0
    %205 = vmatpush2.msra.mxu0 0.0
    %206 = vmatprep.subr.mxu0 0.0
    %207 = vmatpush2.msra.mxu0 0.0
    %208 = vmatprep.subr.mxu0 0.0
    %209 = vmatpush2.msra.mxu0 0.0
    %210 = vmatprep.mubr.f32.mxu0 0.0
    %211 = vmatmul.mubr.f32.gmra.mxu0 %v144
    %v212 = vpop.f32.mrf.mxu0
    %v213 = vadd.f32 0.0, %v212
    %v214 = vpop.f32.mrf.mxu0
    %215 = vdwg.mxu0
    %v216 = vunpack.c.l.bf16 %v142
    %v217 = vadd.f32 %v216, %v213
    %v218 = vtanh.pop %v217
    %v219 = vmax.f32 %v140, %v218
    %s220 = scalar_lea.vmem [#allocation2], 8
    %v221 = vld [vmem:[%s220] sm:$0xf]
    %v223 = vsel %vm64, %v218, 0
    %225 = vmatprep.subr.mxu0 0.0
    %226 = vmatpush1.msra.mxu0 0.0
    %227 = vmatprep.subr.mxu0 0.0
    %228 = vmatpush1.msra.mxu0 0.0
    %229 = vmatprep.subr.mxu0 0.0
    %230 = vmatpush1.msra.mxu0 0.0
    %231 = vmatprep.subr.mxu0 0.0
    %232 = vmatpush1.msra.mxu0 0.0
    %233 = vmatprep.subr.mxu0 0.0
    %234 = vmatpush1.msra.mxu0 0.0
    %235 = vmatprep.subr.mxu0 0.0
    %236 = vmatpush1.msra.mxu0 0.0
    %237 = vmatprep.subr.mxu0 0.0
    %238 = vmatpush1.msra.mxu0 0.0
    %239 = vmatprep.subr.mxu0 0.0
    %240 = vmatpush1.msra.mxu0 0.0
    %241 = vmatprep.subr.mxu0 0.0
    %242 = vmatpush1.msra.mxu0 0.0
    %243 = vmatprep.subr.mxu0 0.0
    %244 = vmatpush1.msra.mxu0 0.0
    %245 = vmatprep.subr.mxu0 0.0
    %246 = vmatpush1.msra.mxu0 0.0
    %247 = vmatprep.subr.mxu0 0.0
    %248 = vmatpush1.msra.mxu0 0.0
    %249 = vmatprep.subr.mxu0 0.0
    %250 = vmatpush1.msra.mxu0 %v62
    %251 = vmatprep.subr.mxu0 0.0
    %252 = vmatpush1.msra.mxu0 %v61
    %253 = vmatprep.subr.mxu0 0.0
    %254 = vmatpush1.msra.mxu0 %v60
    %255 = vmatprep.subr.mxu0 0.0
    %256 = vmatpush1.msra.mxu0 %v59
    %257 = vmatprep.subr.mxu0 0.0
    %258 = vmatpush2.msra.mxu0 0.0
    %259 = vmatprep.subr.mxu0 0.0
    %260 = vmatpush2.msra.mxu0 0.0
    %261 = vmatprep.subr.mxu0 0.0
    %262 = vmatpush2.msra.mxu0 0.0
    %263 = vmatprep.subr.mxu0 0.0
    %264 = vmatpush2.msra.mxu0 0.0
    %265 = vmatprep.subr.mxu0 0.0
    %266 = vmatpush2.msra.mxu0 0.0
    %267 = vmatprep.subr.mxu0 0.0
    %268 = vmatpush2.msra.mxu0 0.0
    %269 = vmatprep.subr.mxu0 0.0
    %270 = vmatpush2.msra.mxu0 0.0
    %271 = vmatprep.subr.mxu0 0.0
    %272 = vmatpush2.msra.mxu0 0.0
    %273 = vmatprep.subr.mxu0 0.0
    %274 = vmatpush2.msra.mxu0 0.0
    %275 = vmatprep.subr.mxu0 0.0
    %276 = vmatpush2.msra.mxu0 0.0
    %277 = vmatprep.subr.mxu0 0.0
    %278 = vmatpush2.msra.mxu0 0.0
    %279 = vmatprep.subr.mxu0 0.0
    %280 = vmatpush2.msra.mxu0 0.0
    %281 = vmatprep.subr.mxu0 0.0
    %282 = vmatpush2.msra.mxu0 0.0
    %283 = vmatprep.subr.mxu0 0.0
    %284 = vmatpush2.msra.mxu0 0.0
    %285 = vmatprep.subr.mxu0 0.0
    %286 = vmatpush2.msra.mxu0 0.0
    %287 = vmatprep.subr.mxu0 0.0
    %288 = vmatpush2.msra.mxu0 0.0
    %289 = vmatprep.mubr.f32.mxu0 0.0
    %290 = vmatmul.mubr.f32.gmra.mxu0 %v223
    %v291 = vpop.f32.mrf.mxu0
    %v292 = vadd.f32 0.0, %v291
    %v293 = vpop.f32.mrf.mxu0
    %294 = vdwg.mxu0
    %v295 = vunpack.c.l.bf16 %v221
    %v296 = vadd.f32 %v295, %v292
    %v297 = vtanh.pop %v296
    %v298 = vmax.f32 %v219, %v297
    %s299 = scalar_lea.vmem [#allocation2], 12
    %v300 = vld [vmem:[%s299] sm:$0xf]
    %v302 = vsel %vm64, %v297, 0
    %304 = vmatprep.subr.mxu0 0.0
    %305 = vmatpush1.msra.mxu0 0.0
    %306 = vmatprep.subr.mxu0 0.0
    %307 = vmatpush1.msra.mxu0 0.0
    %308 = vmatprep.subr.mxu0 0.0
    %309 = vmatpush1.msra.mxu0 0.0
    %310 = vmatprep.subr.mxu0 0.0
    %311 = vmatpush1.msra.mxu0 0.0
    %312 = vmatprep.subr.mxu0 0.0
    %313 = vmatpush1.msra.mxu0 0.0
    %314 = vmatprep.subr.mxu0 0.0
    %315 = vmatpush1.msra.mxu0 0.0
    %316 = vmatprep.subr.mxu0 0.0
    %317 = vmatpush1.msra.mxu0 0.0
    %318 = vmatprep.subr.mxu0 0.0
    %319 = vmatpush1.msra.mxu0 0.0
    %320 = vmatprep.subr.mxu0 0.0
    %321 = vmatpush1.msra.mxu0 0.0
    %322 = vmatprep.subr.mxu0 0.0
    %323 = vmatpush1.msra.mxu0 0.0
    %324 = vmatprep.subr.mxu0 0.0
    %325 = vmatpush1.msra.mxu0 0.0
    %326 = vmatprep.subr.mxu0 0.0
    %327 = vmatpush1.msra.mxu0 0.0
    %328 = vmatprep.subr.mxu0 0.0
    %329 = vmatpush1.msra.mxu0 %v62
    %330 = vmatprep.subr.mxu0 0.0
    %331 = vmatpush1.msra.mxu0 %v61
    %332 = vmatprep.subr.mxu0 0.0
    %333 = vmatpush1.msra.mxu0 %v60
    %334 = vmatprep.subr.mxu0 0.0
    %335 = vmatpush1.msra.mxu0 %v59
    %336 = vmatprep.subr.mxu0 0.0
    %337 = vmatpush2.msra.mxu0 0.0
    %338 = vmatprep.subr.mxu0 0.0
    %339 = vmatpush2.msra.mxu0 0.0
    %340 = vmatprep.subr.mxu0 0.0
    %341 = vmatpush2.msra.mxu0 0.0
    %342 = vmatprep.subr.mxu0 0.0
    %343 = vmatpush2.msra.mxu0 0.0
    %344 = vmatprep.subr.mxu0 0.0
    %345 = vmatpush2.msra.mxu0 0.0
    %346 = vmatprep.subr.mxu0 0.0
    %347 = vmatpush2.msra.mxu0 0.0
    %348 = vmatprep.subr.mxu0 0.0
    %349 = vmatpush2.msra.mxu0 0.0
    %350 = vmatprep.subr.mxu0 0.0
    %351 = vmatpush2.msra.mxu0 0.0
    %352 = vmatprep.subr.mxu0 0.0
    %353 = vmatpush2.msra.mxu0 0.0
    %354 = vmatprep.subr.mxu0 0.0
    %355 = vmatpush2.msra.mxu0 0.0
    %356 = vmatprep.subr.mxu0 0.0
    %357 = vmatpush2.msra.mxu0 0.0
    %358 = vmatprep.subr.mxu0 0.0
    %359 = vmatpush2.msra.mxu0 0.0
    %360 = vmatprep.subr.mxu0 0.0
    %361 = vmatpush2.msra.mxu0 0.0
    %362 = vmatprep.subr.mxu0 0.0
    %363 = vmatpush2.msra.mxu0 0.0
    %364 = vmatprep.subr.mxu0 0.0
    %365 = vmatpush2.msra.mxu0 0.0
    %366 = vmatprep.subr.mxu0 0.0
    %367 = vmatpush2.msra.mxu0 0.0
    %368 = vmatprep.mubr.f32.mxu0 0.0
    %369 = vmatmul.mubr.f32.gmra.mxu0 %v302
    %v370 = vpop.f32.mrf.mxu0
    %v371 = vadd.f32 0.0, %v370
    %v372 = vpop.f32.mrf.mxu0
    %373 = vdwg.mxu0
    %v374 = vunpack.c.l.bf16 %v300
    %v375 = vadd.f32 %v374, %v371
    %v376 = vtanh.pop %v375
    %v377 = vmax.f32 %v298, %v376
    %s378 = scalar_lea.vmem [#allocation2], 16
    %v379 = vld [vmem:[%s378] sm:$0xf]
    %v381 = vsel %vm64, %v376, 0
    %383 = vmatprep.subr.mxu0 0.0
    %384 = vmatpush1.msra.mxu0 0.0
    %385 = vmatprep.subr.mxu0 0.0
    %386 = vmatpush1.msra.mxu0 0.0
    %387 = vmatprep.subr.mxu0 0.0
    %388 = vmatpush1.msra.mxu0 0.0
    %389 = vmatprep.subr.mxu0 0.0
    %390 = vmatpush1.msra.mxu0 0.0
    %391 = vmatprep.subr.mxu0 0.0
    %392 = vmatpush1.msra.mxu0 0.0
    %393 = vmatprep.subr.mxu0 0.0
    %394 = vmatpush1.msra.mxu0 0.0
    %395 = vmatprep.subr.mxu0 0.0
    %396 = vmatpush1.msra.mxu0 0.0
    %397 = vmatprep.subr.mxu0 0.0
    %398 = vmatpush1.msra.mxu0 0.0
    %399 = vmatprep.subr.mxu0 0.0
    %400 = vmatpush1.msra.mxu0 0.0
    %401 = vmatprep.subr.mxu0 0.0
    %402 = vmatpush1.msra.mxu0 0.0
    %403 = vmatprep.subr.mxu0 0.0
    %404 = vmatpush1.msra.mxu0 0.0
    %405 = vmatprep.subr.mxu0 0.0
    %406 = vmatpush1.msra.mxu0 0.0
    %407 = vmatprep.subr.mxu0 0.0
    %408 = vmatpush1.msra.mxu0 %v62
    %409 = vmatprep.subr.mxu0 0.0
    %410 = vmatpush1.msra.mxu0 %v61
    %411 = vmatprep.subr.mxu0 0.0
    %412 = vmatpush1.msra.mxu0 %v60
    %413 = vmatprep.subr.mxu0 0.0
    %414 = vmatpush1.msra.mxu0 %v59
    %415 = vmatprep.subr.mxu0 0.0
    %416 = vmatpush2.msra.mxu0 0.0
    %417 = vmatprep.subr.mxu0 0.0
    %418 = vmatpush2.msra.mxu0 0.0
    %419 = vmatprep.subr.mxu0 0.0
    %420 = vmatpush2.msra.mxu0 0.0
    %421 = vmatprep.subr.mxu0 0.0
    %422 = vmatpush2.msra.mxu0 0.0
    %423 = vmatprep.subr.mxu0 0.0
    %424 = vmatpush2.msra.mxu0 0.0
    %425 = vmatprep.subr.mxu0 0.0
    %426 = vmatpush2.msra.mxu0 0.0
    %427 = vmatprep.subr.mxu0 0.0
    %428 = vmatpush2.msra.mxu0 0.0
    %429 = vmatprep.subr.mxu0 0.0
    %430 = vmatpush2.msra.mxu0 0.0
    %431 = vmatprep.subr.mxu0 0.0
    %432 = vmatpush2.msra.mxu0 0.0
    %433 = vmatprep.subr.mxu0 0.0
    %434 = vmatpush2.msra.mxu0 0.0
    %435 = vmatprep.subr.mxu0 0.0
    %436 = vmatpush2.msra.mxu0 0.0
    %437 = vmatprep.subr.mxu0 0.0
    %438 = vmatpush2.msra.mxu0 0.0
    %439 = vmatprep.subr.mxu0 0.0
    %440 = vmatpush2.msra.mxu0 0.0
    %441 = vmatprep.subr.mxu0 0.0
    %442 = vmatpush2.msra.mxu0 0.0
    %443 = vmatprep.subr.mxu0 0.0
    %444 = vmatpush2.msra.mxu0 0.0
    %445 = vmatprep.subr.mxu0 0.0
    %446 = vmatpush2.msra.mxu0 0.0
    %447 = vmatprep.mubr.f32.mxu0 0.0
    %448 = vmatmul.mubr.f32.gmra.mxu0 %v381
    %v449 = vpop.f32.mrf.mxu0
    %v450 = vadd.f32 0.0, %v449
    %v451 = vpop.f32.mrf.mxu0
    %452 = vdwg.mxu0
    %v453 = vunpack.c.l.bf16 %v379
    %v454 = vadd.f32 %v453, %v450
    %v455 = vtanh.pop %v454
    %v456 = vmax.f32 %v377, %v455
    %s457 = scalar_lea.vmem [#allocation2], 20
    %v458 = vld [vmem:[%s457] sm:$0xf]
    %v460 = vsel %vm64, %v455, 0
    %462 = vmatprep.subr.mxu0 0.0
    %463 = vmatpush1.msra.mxu0 0.0
    %464 = vmatprep.subr.mxu0 0.0
    %465 = vmatpush1.msra.mxu0 0.0
    %466 = vmatprep.subr.mxu0 0.0
    %467 = vmatpush1.msra.mxu0 0.0
    %468 = vmatprep.subr.mxu0 0.0
    %469 = vmatpush1.msra.mxu0 0.0
    %470 = vmatprep.subr.mxu0 0.0
    %471 = vmatpush1.msra.mxu0 0.0
    %472 = vmatprep.subr.mxu0 0.0
    %473 = vmatpush1.msra.mxu0 0.0
    %474 = vmatprep.subr.mxu0 0.0
    %475 = vmatpush1.msra.mxu0 0.0
    %476 = vmatprep.subr.mxu0 0.0
    %477 = vmatpush1.msra.mxu0 0.0
    %478 = vmatprep.subr.mxu0 0.0
    %479 = vmatpush1.msra.mxu0 0.0
    %480 = vmatprep.subr.mxu0 0.0
    %481 = vmatpush1.msra.mxu0 0.0
    %482 = vmatprep.subr.mxu0 0.0
    %483 = vmatpush1.msra.mxu0 0.0
    %484 = vmatprep.subr.mxu0 0.0
    %485 = vmatpush1.msra.mxu0 0.0
    %486 = vmatprep.subr.mxu0 0.0
    %487 = vmatpush1.msra.mxu0 %v62
    %488 = vmatprep.subr.mxu0 0.0
    %489 = vmatpush1.msra.mxu0 %v61
    %490 = vmatprep.subr.mxu0 0.0
    %491 = vmatpush1.msra.mxu0 %v60
    %492 = vmatprep.subr.mxu0 0.0
    %493 = vmatpush1.msra.mxu0 %v59
    %494 = vmatprep.subr.mxu0 0.0
    %495 = vmatpush2.msra.mxu0 0.0
    %496 = vmatprep.subr.mxu0 0.0
    %497 = vmatpush2.msra.mxu0 0.0
    %498 = vmatprep.subr.mxu0 0.0
    %499 = vmatpush2.msra.mxu0 0.0
    %500 = vmatprep.subr.mxu0 0.0
    %501 = vmatpush2.msra.mxu0 0.0
    %502 = vmatprep.subr.mxu0 0.0
    %503 = vmatpush2.msra.mxu0 0.0
    %504 = vmatprep.subr.mxu0 0.0
    %505 = vmatpush2.msra.mxu0 0.0
    %506 = vmatprep.subr.mxu0 0.0
    %507 = vmatpush2.msra.mxu0 0.0
    %508 = vmatprep.subr.mxu0 0.0
    %509 = vmatpush2.msra.mxu0 0.0
    %510 = vmatprep.subr.mxu0 0.0
    %511 = vmatpush2.msra.mxu0 0.0
    %512 = vmatprep.subr.mxu0 0.0
    %513 = vmatpush2.msra.mxu0 0.0
    %514 = vmatprep.subr.mxu0 0.0
    %515 = vmatpush2.msra.mxu0 0.0
    %516 = vmatprep.subr.mxu0 0.0
    %517 = vmatpush2.msra.mxu0 0.0
    %518 = vmatprep.subr.mxu0 0.0
    %519 = vmatpush2.msra.mxu0 0.0
    %520 = vmatprep.subr.mxu0 0.0
    %521 = vmatpush2.msra.mxu0 0.0
    %522 = vmatprep.subr.mxu0 0.0
    %523 = vmatpush2.msra.mxu0 0.0
    %524 = vmatprep.subr.mxu0 0.0
    %525 = vmatpush2.msra.mxu0 0.0
    %526 = vmatprep.mubr.f32.mxu0 0.0
    %527 = vmatmul.mubr.f32.gmra.mxu0 %v460
    %v528 = vpop.f32.mrf.mxu0
    %v529 = vadd.f32 0.0, %v528
    %v530 = vpop.f32.mrf.mxu0
    %531 = vdwg.mxu0
    %v532 = vunpack.c.l.bf16 %v458
    %v533 = vadd.f32 %v532, %v529
    %v534 = vtanh.pop %v533
    %v535 = vmax.f32 %v456, %v534
    %s536 = scalar_lea.vmem [#allocation2], 24
    %v537 = vld [vmem:[%s536] sm:$0xf]
    %v539 = vsel %vm64, %v534, 0
    %541 = vmatprep.subr.mxu0 0.0
    %542 = vmatpush1.msra.mxu0 0.0
    %543 = vmatprep.subr.mxu0 0.0
    %544 = vmatpush1.msra.mxu0 0.0
    %545 = vmatprep.subr.mxu0 0.0
    %546 = vmatpush1.msra.mxu0 0.0
    %547 = vmatprep.subr.mxu0 0.0
    %548 = vmatpush1.msra.mxu0 0.0
    %549 = vmatprep.subr.mxu0 0.0
    %550 = vmatpush1.msra.mxu0 0.0
    %551 = vmatprep.subr.mxu0 0.0
    %552 = vmatpush1.msra.mxu0 0.0
    %553 = vmatprep.subr.mxu0 0.0
    %554 = vmatpush1.msra.mxu0 0.0
    %555 = vmatprep.subr.mxu0 0.0
    %556 = vmatpush1.msra.mxu0 0.0
    %557 = vmatprep.subr.mxu0 0.0
    %558 = vmatpush1.msra.mxu0 0.0
    %559 = vmatprep.subr.mxu0 0.0
    %560 = vmatpush1.msra.mxu0 0.0
    %561 = vmatprep.subr.mxu0 0.0
    %562 = vmatpush1.msra.mxu0 0.0
    %563 = vmatprep.subr.mxu0 0.0
    %564 = vmatpush1.msra.mxu0 0.0
    %565 = vmatprep.subr.mxu0 0.0
    %566 = vmatpush1.msra.mxu0 %v62
    %567 = vmatprep.subr.mxu0 0.0
    %568 = vmatpush1.msra.mxu0 %v61
    %569 = vmatprep.subr.mxu0 0.0
    %570 = vmatpush1.msra.mxu0 %v60
    %571 = vmatprep.subr.mxu0 0.0
    %572 = vmatpush1.msra.mxu0 %v59
    %573 = vmatprep.subr.mxu0 0.0
    %574 = vmatpush2.msra.mxu0 0.0
    %575 = vmatprep.subr.mxu0 0.0
    %576 = vmatpush2.msra.mxu0 0.0
    %577 = vmatprep.subr.mxu0 0.0
    %578 = vmatpush2.msra.mxu0 0.0
    %579 = vmatprep.subr.mxu0 0.0
    %580 = vmatpush2.msra.mxu0 0.0
    %581 = vmatprep.subr.mxu0 0.0
    %582 = vmatpush2.msra.mxu0 0.0
    %583 = vmatprep.subr.mxu0 0.0
    %584 = vmatpush2.msra.mxu0 0.0
    %585 = vmatprep.subr.mxu0 0.0
    %586 = vmatpush2.msra.mxu0 0.0
    %587 = vmatprep.subr.mxu0 0.0
    %588 = vmatpush2.msra.mxu0 0.0
    %589 = vmatprep.subr.mxu0 0.0
    %590 = vmatpush2.msra.mxu0 0.0
    %591 = vmatprep.subr.mxu0 0.0
    %592 = vmatpush2.msra.mxu0 0.0
    %593 = vmatprep.subr.mxu0 0.0
    %594 = vmatpush2.msra.mxu0 0.0
    %595 = vmatprep.subr.mxu0 0.0
    %596 = vmatpush2.msra.mxu0 0.0
    %597 = vmatprep.subr.mxu0 0.0
    %598 = vmatpush2.msra.mxu0 0.0
    %599 = vmatprep.subr.mxu0 0.0
    %600 = vmatpush2.msra.mxu0 0.0
    %601 = vmatprep.subr.mxu0 0.0
    %602 = vmatpush2.msra.mxu0 0.0
    %603 = vmatprep.subr.mxu0 0.0
    %604 = vmatpush2.msra.mxu0 0.0
    %605 = vmatprep.mubr.f32.mxu0 0.0
    %606 = vmatmul.mubr.f32.gmra.mxu0 %v539
    %v607 = vpop.f32.mrf.mxu0
    %v608 = vadd.f32 0.0, %v607
    %v609 = vpop.f32.mrf.mxu0
    %610 = vdwg.mxu0
    %v611 = vunpack.c.l.bf16 %v537
    %v612 = vadd.f32 %v611, %v608
    %v613 = vtanh.pop %v612
    %v614 = vmax.f32 %v535, %v613
    %s615 = scalar_lea.vmem [#allocation2], 28
    %v616 = vld [vmem:[%s615] sm:$0xf]
    %v618 = vsel %vm64, %v613, 0
    %620 = vmatprep.subr.mxu0 0.0
    %621 = vmatpush1.msra.mxu0 0.0
    %622 = vmatprep.subr.mxu0 0.0
    %623 = vmatpush1.msra.mxu0 0.0
    %624 = vmatprep.subr.mxu0 0.0
    %625 = vmatpush1.msra.mxu0 0.0
    %626 = vmatprep.subr.mxu0 0.0
    %627 = vmatpush1.msra.mxu0 0.0
    %628 = vmatprep.subr.mxu0 0.0
    %629 = vmatpush1.msra.mxu0 0.0
    %630 = vmatprep.subr.mxu0 0.0
    %631 = vmatpush1.msra.mxu0 0.0
    %632 = vmatprep.subr.mxu0 0.0
    %633 = vmatpush1.msra.mxu0 0.0
    %634 = vmatprep.subr.mxu0 0.0
    %635 = vmatpush1.msra.mxu0 0.0
    %636 = vmatprep.subr.mxu0 0.0
    %637 = vmatpush1.msra.mxu0 0.0
    %638 = vmatprep.subr.mxu0 0.0
    %639 = vmatpush1.msra.mxu0 0.0
    %640 = vmatprep.subr.mxu0 0.0
    %641 = vmatpush1.msra.mxu0 0.0
    %642 = vmatprep.subr.mxu0 0.0
    %643 = vmatpush1.msra.mxu0 0.0
    %644 = vmatprep.subr.mxu0 0.0
    %645 = vmatpush1.msra.mxu0 %v62
    %646 = vmatprep.subr.mxu0 0.0
    %647 = vmatpush1.msra.mxu0 %v61
    %648 = vmatprep.subr.mxu0 0.0
    %649 = vmatpush1.msra.mxu0 %v60
    %650 = vmatprep.subr.mxu0 0.0
    %651 = vmatpush1.msra.mxu0 %v59
    %652 = vmatprep.subr.mxu0 0.0
    %653 = vmatpush2.msra.mxu0 0.0
    %654 = vmatprep.subr.mxu0 0.0
    %655 = vmatpush2.msra.mxu0 0.0
    %656 = vmatprep.subr.mxu0 0.0
    %657 = vmatpush2.msra.mxu0 0.0
    %658 = vmatprep.subr.mxu0 0.0
    %659 = vmatpush2.msra.mxu0 0.0
    %660 = vmatprep.subr.mxu0 0.0
    %661 = vmatpush2.msra.mxu0 0.0
    %662 = vmatprep.subr.mxu0 0.0
    %663 = vmatpush2.msra.mxu0 0.0
    %664 = vmatprep.subr.mxu0 0.0
    %665 = vmatpush2.msra.mxu0 0.0
    %666 = vmatprep.subr.mxu0 0.0
    %667 = vmatpush2.msra.mxu0 0.0
    %668 = vmatprep.subr.mxu0 0.0
    %669 = vmatpush2.msra.mxu0 0.0
    %670 = vmatprep.subr.mxu0 0.0
    %671 = vmatpush2.msra.mxu0 0.0
    %672 = vmatprep.subr.mxu0 0.0
    %673 = vmatpush2.msra.mxu0 0.0
    %674 = vmatprep.subr.mxu0 0.0
    %675 = vmatpush2.msra.mxu0 0.0
    %676 = vmatprep.subr.mxu0 0.0
    %677 = vmatpush2.msra.mxu0 0.0
    %678 = vmatprep.subr.mxu0 0.0
    %679 = vmatpush2.msra.mxu0 0.0
    %680 = vmatprep.subr.mxu0 0.0
    %681 = vmatpush2.msra.mxu0 0.0
    %682 = vmatprep.subr.mxu0 0.0
    %683 = vmatpush2.msra.mxu0 0.0
    %684 = vmatprep.mubr.f32.mxu0 0.0
    %685 = vmatmul.mubr.f32.gmra.mxu0 %v618
    %v686 = vpop.f32.mrf.mxu0
    %v687 = vadd.f32 0.0, %v686
    %v688 = vpop.f32.mrf.mxu0
    %689 = vdwg.mxu0
    %v690 = vunpack.c.l.bf16 %v616
    %v691 = vadd.f32 %v690, %v687
    %v692 = vtanh.pop %v691
    %v693 = vmax.f32 %v614, %v692
    %v694 = vld [vmem:[#allocation7] sm:$0xff]
    %v695 = vld [vmem:[#allocation7 + $0x8] sm:$0xff]
    %v696 = vld [vmem:[#allocation7 + $0x10] sm:$0xff]
    %v697 = vld [vmem:[#allocation7 + $0x18] sm:$0xff]
    %v698 = vld [vmem:[%s3] sm:$0x1]
    %v700 = vlaneseq
    %v701 = vshrl.u32 %v700, 7
    %v702 = vsub.s32 0, %v701
    %v703 = vrot.slane %v698, %v702
    %v706 = vsel %vm64, %v693, 0
    %708 = vmatprep.subr.mxu0 0.0
    %709 = vmatpush1.msra.mxu0 0.0
    %710 = vmatprep.subr.mxu0 0.0
    %711 = vmatpush1.msra.mxu0 0.0
    %712 = vmatprep.subr.mxu0 0.0
    %713 = vmatpush1.msra.mxu0 0.0
    %714 = vmatprep.subr.mxu0 0.0
    %715 = vmatpush1.msra.mxu0 0.0
    %716 = vmatprep.subr.mxu0 0.0
    %717 = vmatpush1.msra.mxu0 0.0
    %718 = vmatprep.subr.mxu0 0.0
    %719 = vmatpush1.msra.mxu0 0.0
    %720 = vmatprep.subr.mxu0 0.0
    %721 = vmatpush1.msra.mxu0 0.0
    %722 = vmatprep.subr.mxu0 0.0
    %723 = vmatpush1.msra.mxu0 0.0
    %724 = vmatprep.subr.mxu0 0.0
    %725 = vmatpush1.msra.mxu0 0.0
    %726 = vmatprep.subr.mxu0 0.0
    %727 = vmatpush1.msra.mxu0 0.0
    %728 = vmatprep.subr.mxu0 0.0
    %729 = vmatpush1.msra.mxu0 0.0
    %730 = vmatprep.subr.mxu0 0.0
    %731 = vmatpush1.msra.mxu0 0.0
    %732 = vmatprep.subr.mxu0 0.0
    %733 = vmatpush1.msra.mxu0 %v697
    %734 = vmatprep.subr.mxu0 0.0
    %735 = vmatpush1.msra.mxu0 %v696
    %736 = vmatprep.subr.mxu0 0.0
    %737 = vmatpush1.msra.mxu0 %v695
    %738 = vmatprep.subr.mxu0 0.0
    %739 = vmatpush1.msra.mxu0 %v694
    %740 = vmatprep.subr.mxu0 0.0
    %741 = vmatpush2.msra.mxu0 0.0
    %742 = vmatprep.subr.mxu0 0.0
    %743 = vmatpush2.msra.mxu0 0.0
    %744 = vmatprep.subr.mxu0 0.0
    %745 = vmatpush2.msra.mxu0 0.0
    %746 = vmatprep.subr.mxu0 0.0
    %747 = vmatpush2.msra.mxu0 0.0
    %748 = vmatprep.subr.mxu0 0.0
    %749 = vmatpush2.msra.mxu0 0.0
    %750 = vmatprep.subr.mxu0 0.0
    %751 = vmatpush2.msra.mxu0 0.0
    %752 = vmatprep.subr.mxu0 0.0
    %753 = vmatpush2.msra.mxu0 0.0
    %754 = vmatprep.subr.mxu0 0.0
    %755 = vmatpush2.msra.mxu0 0.0
    %756 = vmatprep.subr.mxu0 0.0
    %757 = vmatpush2.msra.mxu0 0.0
    %758 = vmatprep.subr.mxu0 0.0
    %759 = vmatpush2.msra.mxu0 0.0
    %760 = vmatprep.subr.mxu0 0.0
    %761 = vmatpush2.msra.mxu0 0.0
    %762 = vmatprep.subr.mxu0 0.0
    %763 = vmatpush2.msra.mxu0 0.0
    %764 = vmatprep.subr.mxu0 0.0
    %765 = vmatpush2.msra.mxu0 0.0
    %766 = vmatprep.subr.mxu0 0.0
    %767 = vmatpush2.msra.mxu0 0.0
    %768 = vmatprep.subr.mxu0 0.0
    %769 = vmatpush2.msra.mxu0 0.0
    %770 = vmatprep.subr.mxu0 0.0
    %771 = vmatpush2.msra.mxu0 0.0
    %772 = vmatprep.mubr.f32.mxu0 0.0
    %773 = vmatmul.mubr.f32.gmra.mxu0 %v706
    %v774 = vpop.f32.mrf.mxu0
    %v775 = vadd.f32 %v703, %v774
    %v776 = vpop.f32.mrf.mxu0
    %777 = vdwg.mxu0
    %778 = vst [vmem:[#allocation8] sm:$0xff] %v775
    // Predicated region
    $region30: #{tpu_custom_call.1} parent=1 // pred_check
      _
    $region31: #{tpu_custom_call.1} parent=1 // pred_check_branch
      %780 = sbr.rel (0) target = $region33
    $region32: #{tpu_custom_call.1} parent=1 // pred_region
      %s782 = ssub.s32 128, 128
      %783 = vsyncadd [#allocation4], %s782
      %s785 = sshll.u32 [#allocation8], 4
      %s786 = int_to_ptr.vmem [resolvable:$true] %s785
      %788 = dma.vmem_to_hbm [thread:$0]  %s786, 128, %s4, [#allocation4]
    $region33: #{tpu_custom_call.1} parent=1 // pred_fallthru
      _
    // Predicated region
    $region34: #{tpu_custom_call.1} parent=1 // pred_check
      _
    $region35: #{tpu_custom_call.1} parent=1 // pred_check_branch
      %790 = sbr.rel (0) target = $region37
    $region36: #{tpu_custom_call.1} parent=1 // pred_region
      %791 = dma.done [#allocation4], 128
    $region37: #{tpu_custom_call.1} parent=1 // pred_fallthru
      _
    %792 = vsyncpa [#allocation3], 1
    %793 = vsyncpa [#allocation6], 1
    %794 = vsyncpa [#allocation4], 1

</llo_original>
